<compile_context>
chip_gen: v5e
topology: v5e:2x2
jax: 0.10.0
libtpu: 0.0.40
codegen_flags: <defaults>
</compile_context>

<pallas_src>
import jax
import jax.numpy as jnp
from jax.experimental import pallas as pl
from jax.experimental.pallas import tpu as pltpu

LANE = 128


def _alpha_kernel(x_ref, o_ref):
    # y = 1 - exp(-relu(x)); computed in f32 (exp rides the EUP slot, which has
    # plenty of slack in this HBM-bound kernel), cast back to input dtype on store.
    x = x_ref[...].astype(jnp.float32)
    r = jnp.maximum(x, 0.0)
    o_ref[...] = (1.0 - jnp.exp(-r)).astype(o_ref.dtype)


def _device_tuning():
    """(target_block_bytes, vmem_limit_bytes, has_two_tensorcores) for this device."""
    try:
        kind = jax.devices()[0].device_kind.lower()
    except Exception:  # pragma: no cover - defensive
        kind = ""
    if "v7" in kind or "tpu7" in kind:
        # v7x: ~3.2 TB/s HBM, only 64 MiB VMEM per TC, 2 TCs per chip.
        return 8 << 20, 48 << 20, True
    if "v6" in kind:
        # v6e: ~1.4 TB/s HBM, 128 MiB VMEM, single TC.
        return 8 << 20, 64 << 20, False
    if "v5" in kind:
        # v5e/v5p: ~0.8 TB/s HBM; modest blocks already amortize step overhead,
        # but raise the 16 MiB default scoped limit so 4x4 MiB buffers fit.
        return 4 << 20, 32 << 20, False
    # Unknown / older chips: stay within the default scoped VMEM.
    return 2 << 20, None, False


def _round_up(v: int, m: int) -> int:
    return ((v + m - 1) // m) * m


def _alpha_2d(x2d: jax.Array) -> jax.Array:
    """Run the Alpha kernel on a lane-dense (rows, 128) array."""
    rows, lane = x2d.shape
    assert lane == LANE
    dtype = x2d.dtype
    itemsize = jnp.dtype(dtype).itemsize
    # Sub-32-bit dtypes pack along sublanes -> dtype-aware row granule.
    sublane = {4: 8, 2: 16, 1: 32}.get(itemsize, 8)

    target_block_bytes, vmem_limit, multi_tc = _device_tuning()
    target_rows = max(sublane, target_block_bytes // (LANE * itemsize))
    target_rows = (target_rows // sublane) * sublane

    if rows <= target_rows:
        if multi_tc and rows >= 2 * sublane:
            # Split into 2 grid steps so both v7x TensorCores get work.
            tile_rows = _round_up((rows + 1) // 2, sublane)
        else:
            # Single-TC chip (or tiny input): one full-extent block.
            tile_rows = rows
    else:
        tile_rows = target_rows
        if multi_tc:
            # Keep the grid-step count even so the 2 TCs stay load-balanced.
            steps = pl.cdiv(rows, tile_rows)
            if steps > 1 and steps % 2 == 1:
                cand = _round_up(pl.cdiv(rows, steps + 1), sublane)
                if cand >= sublane and pl.cdiv(rows, cand) % 2 == 0:
                    tile_rows = cand

    grid = (pl.cdiv(rows, tile_rows),)
    n = rows * LANE

    return pl.pallas_call(
        _alpha_kernel,
        out_shape=jax.ShapeDtypeStruct((rows, LANE), dtype),
        grid_spec=pltpu.PrefetchScalarGridSpec(
            num_scalar_prefetch=0,
            grid=grid,
            in_specs=[pl.BlockSpec((tile_rows, LANE), lambda i: (i, 0))],
            out_specs=pl.BlockSpec((tile_rows, LANE), lambda i: (i, 0)),
        ),
        compiler_params=pltpu.CompilerParams(
            dimension_semantics=("parallel",),
            vmem_limit_bytes=vmem_limit,
        ),
        # Same shape/dtype in and out: let XLA reuse the input HBM buffer.
        input_output_aliases={0: 0},
        cost_estimate=pl.CostEstimate(
            flops=3 * n,
            transcendentals=n,
            bytes_accessed=2 * n * itemsize,
        ),
    )(x2d)


def alpha_pallas(x: jax.Array) -> jax.Array:
    """Forward pass of Alpha: 1 - exp(-relu(x)), as a Pallas TPU kernel."""
    orig_shape = x.shape
    dtype = x.dtype
    n = x.size
    if n == 0:
        return x

    if n % LANE == 0:
        # Common case: reshape to (rows, 128) is a free view; single HBM pass.
        out2d = _alpha_2d(jnp.reshape(x, (n // LANE, LANE)))
        return jnp.reshape(out2d, orig_shape)

    # Ragged fallback: kernel on the 128-aligned prefix, plain jnp on the tiny
    # (<128 element) tail — avoids whole-tensor pad + slice copies.
    aligned = (n // LANE) * LANE
    x_flat = jnp.reshape(x, (-1,))
    tail = x_flat[aligned:]
    tail_out = (1.0 - jnp.exp(-jnp.maximum(tail.astype(jnp.float32), 0.0))).astype(dtype)
    if aligned == 0:
        return jnp.reshape(tail_out, orig_shape)
    head_in = jnp.reshape(x_flat[:aligned], (aligned // LANE, LANE))
    head_out = jnp.reshape(_alpha_2d(head_in), (-1,))
    return jnp.reshape(jnp.concatenate([head_out, tail_out]), orig_shape)


if __name__ == "__main__":
    key = jax.random.PRNGKey(0)
    # Small NCHW activation tensor consistent with the module (batch=2, C=4, 16x16).
    x = jax.random.normal(key, (2, 4, 16, 16), dtype=jnp.float32)
    ref = 1.0 - jnp.exp(-jnp.maximum(x, 0.0))

    y = alpha_pallas(x)
    jax.block_until_ready(y)
    assert y.shape == x.shape and y.dtype == x.dtype
    assert bool(jnp.allclose(y, ref, atol=1e-6, rtol=1e-6))

    # Also exercise the ragged (size % 128 != 0) fallback path.
    x2 = jax.random.normal(jax.random.PRNGKey(1), (3, 50), dtype=jnp.float32)
    ref2 = 1.0 - jnp.exp(-jnp.maximum(x2, 0.0))
    y2 = alpha_pallas(x2)
    jax.block_until_ready(y2)
    assert y2.shape == x2.shape and y2.dtype == x2.dtype
    assert bool(jnp.allclose(y2, ref2, atol=1e-6, rtol=1e-6))

    print("KERNEL_OK")
</pallas_src>

<mosaic_0001>
module attributes {stable_mosaic.version = 11 : i64} {
  func.func @_alpha_kernel(%arg0: i32, %arg1: memref<16x128xf32, #tpu.memory_space<vmem>>, %arg2: memref<16x128xf32, #tpu.memory_space<vmem>>) attributes {dimension_semantics = [#tpu.dimension_semantics<parallel>], iteration_bounds = array<i64: 1>, scalar_prefetch = 0 : i64, scratch_operands = 0 : i64, tpu.core_type = #tpu.core_type<tc>, window_params = [{transform_indices = @transform_0, window_bounds = array<i64: 16, 128>}, {transform_indices = @transform_1, window_bounds = array<i64: 16, 128>}]} {
    %c0 = arith.constant 0 : index
    %c0_0 = arith.constant 0 : index
    %0 = vector.load %arg1[%c0, %c0_0] : memref<16x128xf32, #tpu.memory_space<vmem>>, vector<16x128xf32>
    %cst = arith.constant 0.000000e+00 : f32
    %1 = vector.broadcast %cst : f32 to vector<16x128xf32>
    %2 = arith.maximumf %0, %1 : vector<16x128xf32>
    %cst_1 = arith.constant 0.000000e+00 : f32
    %3 = vector.broadcast %cst_1 : f32 to vector<16x128xf32>
    %4 = arith.subf %3, %2 : vector<16x128xf32>
    %5 = math.exp %4 : vector<16x128xf32>
    %cst_2 = arith.constant 1.000000e+00 : f32
    %6 = vector.broadcast %cst_2 : f32 to vector<16x128xf32>
    %7 = arith.subf %6, %5 : vector<16x128xf32>
    %c0_3 = arith.constant 0 : index
    %c0_4 = arith.constant 0 : index
    %8 = vector.load %arg2[%c0_3, %c0_4] : memref<16x128xf32, #tpu.memory_space<vmem>>, vector<16x128xf32>
    tpu.vector_store %arg2[%c0_3, %c0_4], %7 {strides = array<i32>} : memref<16x128xf32, #tpu.memory_space<vmem>>, vector<16x128xf32>,
    return
  }
  func.func @transform_0(%arg0: i32) -> (i32, i32) {
    %c0_i32 = arith.constant 0 : i32
    %c0_i32_0 = arith.constant 0 : i32
    return %arg0, %c0_i32 : i32, i32
  }
  func.func @transform_1(%arg0: i32) -> (i32, i32) {
    %c0_i32 = arith.constant 0 : i32
    %c0_i32_0 = arith.constant 0 : i32
    return %arg0, %c0_i32 : i32, i32
  }
}

</mosaic_0001>

<llo_original>
// kernel: tpu_custom_call.1
$region0: #{tpu_custom_call.1}
  #allocation0 [shape = 'u32[]', space=smem, size = 0x4, offset = 0x4, fixed_abs, tag = 'smem constant byte address 0x4 - core index']
  #allocation1 [shape = 'u32[72,128]{1,0:T(1,128)}', space=vmem, size = 0x9000, scoped, tag = 'internal scratch']
  %s0 = inlined_call_operand.hbm [shape: f32[16,128], index: 0, kind: input, shape index: {}, may-alias: {0,1}]
  %s1 = inlined_call_operand.hbm [shape: f32[16,128], index: 1, kind: output, shape index: {}, may-alias: {0,1}]
  %s2 = sld [smem:[#allocation0]]
  $region18: #{tpu_custom_call.1} parent=0
    _
  %s4 = ssub.s32 1, %s2
  %s5 = scalar_select 0, %s4, %s2
  $region1: #{tpu_custom_call.1} parent=0
    #allocation2 [shape = 'u8[8192]{0}', space=vmem, size = 0x2000, scoped, tag = 'input window, operand 0, single buffered']
    #allocation3 [shape = 's32[1]{0}', space=sflag, size = 0x4, scoped, tag = 'scoped memory for tpu_custom_call.1']
    #allocation4 [shape = 's32[1]{0}', space=sflag, size = 0x4, scoped, tag = 'scoped memory for tpu_custom_call.1']
    #allocation5 [shape = 'u8[8192]{0}', space=vmem, size = 0x2000, scoped, tag = 'output window, operand 0, single buffered']
    %6 = vsyncpa [#allocation3], 0
    %7 = vsyncpa [#allocation4], 0
    // Predicated region
    $region2: #{tpu_custom_call.1} parent=1 // pred_check
      _
    $region3: #{tpu_custom_call.1} parent=1 // pred_check_branch
      %9 = sbr.rel (0) target = $region5
    $region4: #{tpu_custom_call.1} parent=1 // pred_region
      %11 = vsyncadd [#allocation3], 0
      %s12 = sshll.u32 %s0, 4
      %s13 = int_to_ptr.hbm [resolvable:$true] %s12
      %s14 = sshll.u32 [#allocation2], 4
      %s15 = int_to_ptr.vmem [resolvable:$true] %s14
      %20 = dma.hbm_to_vmem [thread:$0]  %s13, 256, %s15, [#allocation3], 128, 128, 8
    $region5: #{tpu_custom_call.1} parent=1 // pred_fallthru
      _
    // Predicated region
    $region6: #{tpu_custom_call.1} parent=1 // pred_check
      _
    $region7: #{tpu_custom_call.1} parent=1 // pred_check_branch
      %22 = sbr.rel (0) target = $region9
    $region8: #{tpu_custom_call.1} parent=1 // pred_region
      %24 = dma.done [#allocation3], 256
    $region9: #{tpu_custom_call.1} parent=1 // pred_fallthru
      _
    %v25 = vld [vmem:[#allocation2] sm:$0xff]
    %v26 = vld [vmem:[#allocation2 + $0x8] sm:$0xff]
    %v27 = vmax.f32 %v25, 0.0
    %v28 = vmax.f32 %v26, 0.0
    %v29 = vsub.f32 0.0, %v27
    %v30 = vsub.f32 0.0, %v28
    %v31 = vmul.f32 %v29, 1.442695
    %v32 = vpow.pop %v31
    %v33 = vmul.f32 %v30, 1.442695
    %v34 = vpow.pop %v33
    %v35 = vsub.f32 1.0, %v32
    %v36 = vsub.f32 1.0, %v34
    %37 = vst [vmem:[#allocation5] sm:$0xff] %v35
    %38 = vst [vmem:[#allocation5 + $0x8] sm:$0xff] %v36
    // Predicated region
    $region10: #{tpu_custom_call.1} parent=1 // pred_check
      _
    $region11: #{tpu_custom_call.1} parent=1 // pred_check_branch
      %40 = sbr.rel (0) target = $region13
    $region12: #{tpu_custom_call.1} parent=1 // pred_region
      %42 = vsyncadd [#allocation4], 0
      %s43 = sshll.u32 [#allocation5], 4
      %s44 = int_to_ptr.vmem [resolvable:$true] %s43
      %s45 = sshll.u32 %s1, 4
      %s46 = int_to_ptr.hbm [resolvable:$true] %s45
      %51 = dma.vmem_to_hbm [thread:$0]  %s44, 256, %s46, [#allocation4], 128, 128, 8
    $region13: #{tpu_custom_call.1} parent=1 // pred_fallthru
      _
    // Predicated region
    $region14: #{tpu_custom_call.1} parent=1 // pred_check
      _
    $region15: #{tpu_custom_call.1} parent=1 // pred_check_branch
      %53 = sbr.rel (0) target = $region17
    $region16: #{tpu_custom_call.1} parent=1 // pred_region
      %55 = dma.done [#allocation4], 256
    $region17: #{tpu_custom_call.1} parent=1 // pred_fallthru
      _
    %56 = vsyncpa [#allocation3], 1
    %57 = vsyncpa [#allocation4], 1

</llo_original>
